<compile_context>
chip_gen: v7x
topology: tpu7x:2x2x1
jax: 0.10.0
libtpu: 0.0.40
codegen_flags: <defaults>
</compile_context>

<pallas_src>
import functools

import jax
import jax.numpy as jnp
from jax.experimental import pallas as pl
from jax.experimental.pallas import tpu as pltpu

_LANES = 128


def _round_up(x, m):
    return (x + m - 1) // m * m


# --------------------------------------------------------------------------
# Fused kernel: (split first matmul) + per-layer [matmul -> +shift -> ReLU]
# --------------------------------------------------------------------------
def _make_fused_kernel(num_hidden_layers):
    """num_hidden_layers = number of layers AFTER the first one."""

    def kernel(user_ref, svc_ref, *refs):
        out_ref = refs[-1]
        p = refs[:-1]

        # ---- layer 0: folds torch.cat by splitting W into user/service parts
        w_u, w_s, shift = p[0], p[1], p[2]
        y = jnp.dot(user_ref[...], w_u[...], preferred_element_type=jnp.float32)
        y = y + jnp.dot(svc_ref[...], w_s[...], preferred_element_type=jnp.float32)
        y = jnp.maximum(y + shift[...], 0.0)

        # ---- remaining layers; activations stay resident in VMEM/vregs
        idx = 3
        for _ in range(num_hidden_layers):
            w, shift = p[idx], p[idx + 1]
            idx += 2
            y = jnp.dot(y, w[...], preferred_element_type=jnp.float32)
            y = jnp.maximum(y + shift[...], 0.0)

        out_ref[...] = y.astype(out_ref.dtype)

    return kernel


# --------------------------------------------------------------------------
# Parameter prep (done once, outside the hot path):
#   - eval-mode BN + linear bias already folded into per-feature (scale, shift)
#   - fold `scale` into the weight columns (drops it as a kernel input)
#   - split first layer's W for the concat fold
#   - zero-pad intermediate feature dims to multiples of 128 lanes; the FINAL
#     layer's output width is left unpadded (lane-masked store, 4x less HBM)
# --------------------------------------------------------------------------
def prepare_fused_params(params, user_emb_dim, service_emb_dim):
    n_layers = len(params)
    prepped = []
    fan_in = user_emb_dim + service_emb_dim
    prev_pad = fan_in
    for li, layer in enumerate(params):
        w = layer["w"].astype(jnp.float32)
        scale = layer["scale"].reshape(1, -1).astype(jnp.float32)
        shift = layer["shift"].reshape(1, -1).astype(jnp.float32)
        w = w * scale  # fold BN/bias scale into weight columns (ulp-level)

        f_out = w.shape[1]
        is_last = li == n_layers - 1
        f_out_pad = f_out if is_last else _round_up(f_out, _LANES)
        pad_c = f_out_pad - f_out

        shift_p = jnp.pad(shift, ((0, 0), (0, pad_c)))
        if li == 0:
            w_u = jnp.pad(w[:user_emb_dim], ((0, 0), (0, pad_c)))
            w_s = jnp.pad(w[user_emb_dim:], ((0, 0), (0, pad_c)))
            prepped.append(dict(w_u=w_u, w_s=w_s, shift=shift_p))
        else:
            w_p = jnp.pad(w, ((0, prev_pad - fan_in), (0, pad_c)))
            prepped.append(dict(w=w_p, shift=shift_p))
        fan_in = f_out
        prev_pad = f_out_pad
    return prepped, fan_in  # fan_in == last real (unpadded) output width


# --------------------------------------------------------------------------
# Forward pass
# --------------------------------------------------------------------------
@functools.partial(jax.jit, static_argnames=("out_dim", "batch_tile"))
def content_mlp_forward(user_dense, service_dense, prepped_params, *,
                        out_dim, batch_tile=1024):
    user = user_dense.astype(jnp.float32)
    svc = service_dense.astype(jnp.float32)
    batch, u_dim = user.shape
    s_dim = svc.shape[1]

    # Adaptive batch tiling: bound padding waste, and when there is enough
    # work give the grid >= 2 steps so v7x's two TensorCores both get tiles.
    n_tiles = pl.cdiv(batch, batch_tile)
    if batch >= 16:
        n_tiles = max(n_tiles, 2)
    tb = _round_up(pl.cdiv(batch, n_tiles), 8)
    b_pad = tb * n_tiles
    if b_pad != batch:
        user = jnp.pad(user, ((0, b_pad - batch), (0, 0)))
        svc = jnp.pad(svc, ((0, b_pad - batch), (0, 0)))

    first = prepped_params[0]
    rest = prepped_params[1:]

    # Flatten params into positional kernel inputs + matching full-block specs.
    flat_args = []
    in_specs = [
        pl.BlockSpec((tb, u_dim), lambda i: (i, 0)),
        pl.BlockSpec((tb, s_dim), lambda i: (i, 0)),
    ]

    def _full_spec(arr):
        return pl.BlockSpec(arr.shape, lambda i: (0, 0))

    for name in ("w_u", "w_s", "shift"):
        flat_args.append(first[name])
        in_specs.append(_full_spec(first[name]))
    for layer in rest:
        for name in ("w", "shift"):
            flat_args.append(layer[name])
            in_specs.append(_full_spec(layer[name]))

    # Advisory cost estimate (flops over padded shapes; bytes for all operands).
    flops = 2 * b_pad * (
        first["w_u"].shape[0] * first["w_u"].shape[1]
        + first["w_s"].shape[0] * first["w_s"].shape[1]
    )
    for layer in rest:
        flops += 2 * b_pad * layer["w"].shape[0] * layer["w"].shape[1]
    bytes_accessed = 4 * (
        int(user.size) + int(svc.size) + b_pad * out_dim
        + sum(int(a.size) for a in flat_args)
    )

    cp_kwargs = dict(dimension_semantics=("parallel",))
    if tb >= 2048:
        # v5e's default scoped VMEM is only 16 MiB; give big tiles headroom.
        cp_kwargs["vmem_limit_bytes"] = 64 << 20

    out_padded = pl.pallas_call(
        _make_fused_kernel(len(rest)),
        out_shape=jax.ShapeDtypeStruct((b_pad, out_dim), jnp.float32),
        grid=(n_tiles,),
        in_specs=in_specs,
        out_specs=pl.BlockSpec((tb, out_dim), lambda i: (i, 0)),
        compiler_params=pltpu.CompilerParams(**cp_kwargs),
        cost_estimate=pl.CostEstimate(
            flops=flops, transcendentals=0, bytes_accessed=bytes_accessed
        ),
    )(user, svc, *flat_args)

    if b_pad == batch:
        return out_padded
    return out_padded[:batch]


# --------------------------------------------------------------------------
# Synthetic params mirroring Linear + BatchNorm1d (eval mode) per layer.
# --------------------------------------------------------------------------
def init_content_mlp_params(key, user_emb_dim, service_emb_dim, layers_spec):
    eps = 1e-5
    params = []
    fan_in = user_emb_dim + service_emb_dim
    for width in layers_spec:
        key, kw, kb, kg, kbeta, km, kv = jax.random.split(key, 7)
        w = jax.random.normal(kw, (fan_in, width), jnp.float32) * (
            1.0 / jnp.sqrt(fan_in)
        )
        bias = jax.random.normal(kb, (width,), jnp.float32) * 0.01
        gamma = 1.0 + 0.1 * jax.random.normal(kg, (width,), jnp.float32)
        beta = 0.1 * jax.random.normal(kbeta, (width,), jnp.float32)
        running_mean = 0.1 * jax.random.normal(km, (width,), jnp.float32)
        running_var = jnp.abs(jax.random.normal(kv, (width,), jnp.float32)) + 0.5
        # Fold eval-mode BN + linear bias into per-feature affine.
        scale = gamma / jnp.sqrt(running_var + eps)
        shift = (bias - running_mean) * scale + beta
        params.append(
            dict(w=w, scale=scale.reshape(1, -1), shift=shift.reshape(1, -1))
        )
        fan_in = width
    return params


def _reference_forward(user_dense, service_dense, params):
    x = jnp.concatenate([user_dense, service_dense], axis=1).astype(jnp.float32)
    for layer in params:
        x = jnp.maximum(x @ layer["w"] * layer["scale"] + layer["shift"], 0.0)
    return x


if __name__ == "__main__":
    # TODO(synk): BatchNorm1d training-mode statistics update is not modeled;
    # the kernel implements the eval-mode (running-stats) forward only.
    batch = 8
    user_emb_dim = 16
    service_emb_dim = 16
    layers_spec = (64, 32)

    key = jax.random.PRNGKey(0)
    k_params, k_user, k_service = jax.random.split(key, 3)

    params = init_content_mlp_params(
        k_params, user_emb_dim, service_emb_dim, layers_spec
    )
    prepped, out_dim = prepare_fused_params(params, user_emb_dim, service_emb_dim)

    user_dense = jax.random.normal(k_user, (batch, user_emb_dim), jnp.float32)
    service_dense = jax.random.normal(
        k_service, (batch, service_emb_dim), jnp.float32
    )

    out = content_mlp_forward(
        user_dense, service_dense, prepped, out_dim=out_dim, batch_tile=1024
    )
    jax.block_until_ready(out)

    ref = _reference_forward(user_dense, service_dense, params)
    assert out.shape == (batch, layers_spec[-1])
    assert jnp.allclose(out, ref, atol=1e-4, rtol=1e-4)

    print("KERNEL_OK")
</pallas_src>

<mosaic_0001>
module attributes {stable_mosaic.version = 11 : i64} {
  func.func @kernel(%arg0: i32, %arg1: memref<8x16xf32, #tpu.memory_space<vmem>>, %arg2: memref<8x16xf32, #tpu.memory_space<vmem>>, %arg3: memref<16x128xf32, #tpu.memory_space<vmem>>, %arg4: memref<16x128xf32, #tpu.memory_space<vmem>>, %arg5: memref<1x128xf32, #tpu.memory_space<vmem>>, %arg6: memref<128x32xf32, #tpu.memory_space<vmem>>, %arg7: memref<1x32xf32, #tpu.memory_space<vmem>>, %arg8: memref<8x32xf32, #tpu.memory_space<vmem>>) attributes {dimension_semantics = [#tpu.dimension_semantics<parallel>], iteration_bounds = array<i64: 1>, scalar_prefetch = 0 : i64, scratch_operands = 0 : i64, tpu.core_type = #tpu.core_type<tc>, window_params = [{transform_indices = @transform_0, window_bounds = array<i64: 8, 16>}, {transform_indices = @transform_1, window_bounds = array<i64: 8, 16>}, {pipeline_mode = #tpu.pipeline_mode<synchronous>, transform_indices = @transform_2, window_bounds = array<i64: 16, 128>}, {pipeline_mode = #tpu.pipeline_mode<synchronous>, transform_indices = @transform_3, window_bounds = array<i64: 16, 128>}, {pipeline_mode = #tpu.pipeline_mode<synchronous>, transform_indices = @transform_4, window_bounds = array<i64: 1, 128>}, {pipeline_mode = #tpu.pipeline_mode<synchronous>, transform_indices = @transform_5, window_bounds = array<i64: 128, 32>}, {pipeline_mode = #tpu.pipeline_mode<synchronous>, transform_indices = @transform_6, window_bounds = array<i64: 1, 32>}, {transform_indices = @transform_7, window_bounds = array<i64: 8, 32>}]} {
    %c0 = arith.constant 0 : index
    %c0_0 = arith.constant 0 : index
    %0 = vector.load %arg1[%c0, %c0_0] : memref<8x16xf32, #tpu.memory_space<vmem>>, vector<8x16xf32>
    %c0_1 = arith.constant 0 : index
    %c0_2 = arith.constant 0 : index
    %1 = vector.load %arg3[%c0_1, %c0_2] : memref<16x128xf32, #tpu.memory_space<vmem>>, vector<16x128xf32>
    %cst = arith.constant dense<0.000000e+00> : vector<8x128xf32>
    %2 = tpu.matmul %0, %1, %cst {dimension_numbers = #tpu.dot_dimension_numbers<[1], [0], [0], [1], [0, 0, 1, 1], [], []>} : vector<8x16xf32>, vector<16x128xf32>, vector<8x128xf32> -> vector<8x128xf32>
    %c0_3 = arith.constant 0 : index
    %c0_4 = arith.constant 0 : index
    %3 = vector.load %arg2[%c0_3, %c0_4] : memref<8x16xf32, #tpu.memory_space<vmem>>, vector<8x16xf32>
    %c0_5 = arith.constant 0 : index
    %c0_6 = arith.constant 0 : index
    %4 = vector.load %arg4[%c0_5, %c0_6] : memref<16x128xf32, #tpu.memory_space<vmem>>, vector<16x128xf32>
    %cst_7 = arith.constant dense<0.000000e+00> : vector<8x128xf32>
    %5 = tpu.matmul %3, %4, %cst_7 {dimension_numbers = #tpu.dot_dimension_numbers<[1], [0], [0], [1], [0, 0, 1, 1], [], []>} : vector<8x16xf32>, vector<16x128xf32>, vector<8x128xf32> -> vector<8x128xf32>
    %6 = arith.addf %2, %5 : vector<8x128xf32>
    %c0_8 = arith.constant 0 : index
    %c0_9 = arith.constant 0 : index
    %7 = vector.load %arg5[%c0_8, %c0_9] : memref<1x128xf32, #tpu.memory_space<vmem>>, vector<1x128xf32>
    %8 = vector.broadcast %7 : vector<1x128xf32> to vector<8x128xf32>
    %9 = arith.addf %6, %8 : vector<8x128xf32>
    %cst_10 = arith.constant 0.000000e+00 : f32
    %10 = vector.broadcast %cst_10 : f32 to vector<8x128xf32>
    %11 = arith.maximumf %9, %10 : vector<8x128xf32>
    %c0_11 = arith.constant 0 : index
    %c0_12 = arith.constant 0 : index
    %12 = vector.load %arg6[%c0_11, %c0_12] : memref<128x32xf32, #tpu.memory_space<vmem>>, vector<128x32xf32>
    %cst_13 = arith.constant dense<0.000000e+00> : vector<8x32xf32>
    %13 = tpu.matmul %11, %12, %cst_13 {dimension_numbers = #tpu.dot_dimension_numbers<[1], [0], [0], [1], [0, 0, 1, 1], [], []>} : vector<8x128xf32>, vector<128x32xf32>, vector<8x32xf32> -> vector<8x32xf32>
    %c0_14 = arith.constant 0 : index
    %c0_15 = arith.constant 0 : index
    %14 = vector.load %arg7[%c0_14, %c0_15] : memref<1x32xf32, #tpu.memory_space<vmem>>, vector<1x32xf32>
    %15 = vector.broadcast %14 : vector<1x32xf32> to vector<8x32xf32>
    %16 = arith.addf %13, %15 : vector<8x32xf32>
    %cst_16 = arith.constant 0.000000e+00 : f32
    %17 = vector.broadcast %cst_16 : f32 to vector<8x32xf32>
    %18 = arith.maximumf %16, %17 : vector<8x32xf32>
    %c0_17 = arith.constant 0 : index
    %c0_18 = arith.constant 0 : index
    %19 = vector.load %arg8[%c0_17, %c0_18] : memref<8x32xf32, #tpu.memory_space<vmem>>, vector<8x32xf32>
    tpu.vector_store %arg8[%c0_17, %c0_18], %18 {strides = array<i32>} : memref<8x32xf32, #tpu.memory_space<vmem>>, vector<8x32xf32>,
    return
  }
  func.func @transform_0(%arg0: i32) -> (i32, i32) {
    %c0_i32 = arith.constant 0 : i32
    %c0_i32_0 = arith.constant 0 : i32
    return %arg0, %c0_i32 : i32, i32
  }
  func.func @transform_1(%arg0: i32) -> (i32, i32) {
    %c0_i32 = arith.constant 0 : i32
    %c0_i32_0 = arith.constant 0 : i32
    return %arg0, %c0_i32 : i32, i32
  }
  func.func @transform_2(%arg0: i32) -> (i32, i32) {
    %c0_i32 = arith.constant 0 : i32
    %c0_i32_0 = arith.constant 0 : i32
    %c0_i32_1 = arith.constant 0 : i32
    return %c0_i32, %c0_i32_0 : i32, i32
  }
  func.func @transform_3(%arg0: i32) -> (i32, i32) {
    %c0_i32 = arith.constant 0 : i32
    %c0_i32_0 = arith.constant 0 : i32
    %c0_i32_1 = arith.constant 0 : i32
    return %c0_i32, %c0_i32_0 : i32, i32
  }
  func.func @transform_4(%arg0: i32) -> (i32, i32) {
    %c0_i32 = arith.constant 0 : i32
    %c0_i32_0 = arith.constant 0 : i32
    %c0_i32_1 = arith.constant 0 : i32
    return %c0_i32, %c0_i32_0 : i32, i32
  }
  func.func @transform_5(%arg0: i32) -> (i32, i32) {
    %c0_i32 = arith.constant 0 : i32
    %c0_i32_0 = arith.constant 0 : i32
    %c0_i32_1 = arith.constant 0 : i32
    return %c0_i32, %c0_i32_0 : i32, i32
  }
  func.func @transform_6(%arg0: i32) -> (i32, i32) {
    %c0_i32 = arith.constant 0 : i32
    %c0_i32_0 = arith.constant 0 : i32
    %c0_i32_1 = arith.constant 0 : i32
    return %c0_i32, %c0_i32_0 : i32, i32
  }
  func.func @transform_7(%arg0: i32) -> (i32, i32) {
    %c0_i32 = arith.constant 0 : i32
    %c0_i32_0 = arith.constant 0 : i32
    return %arg0, %c0_i32 : i32, i32
  }
}

</mosaic_0001>

<llo_original>
// kernel: content_mlp_forward.1
$region0: #{content_mlp_forward.1}
  #allocation0 [shape = 'u32[]', space=smem, size = 0x4, offset = 0x4, fixed_abs, tag = 'smem constant byte address 0x4 - core index']
  #allocation1 [shape = 'u32[144,128]{1,0:T(1,128)}', space=vmem, size = 0x12000, scoped, tag = 'internal scratch']
  %s0 = inlined_call_operand.vmem [shape: f32[8,16], index: 0, kind: input, shape index: {}]
  %s1 = inlined_call_operand.vmem [shape: f32[8,16], index: 1, kind: input, shape index: {}]
  %s2 = inlined_call_operand.vmem [shape: f32[16,128], index: 2, kind: input, shape index: {}]
  %s3 = inlined_call_operand.vmem [shape: f32[16,128], index: 3, kind: input, shape index: {}]
  %s4 = inlined_call_operand.vmem [shape: f32[1,128], index: 4, kind: input, shape index: {}]
  %s5 = inlined_call_operand.vmem [shape: f32[128,32], index: 5, kind: input, shape index: {}]
  %s6 = inlined_call_operand.vmem [shape: f32[1,32], index: 6, kind: input, shape index: {}]
  %s7 = inlined_call_operand.hbm [shape: f32[8,32], index: 7, kind: output, shape index: {}]
  %s8 = sld [smem:[#allocation0]]
  $region38: #{content_mlp_forward.1} parent=0
    _
  %s10 = ssub.s32 1, %s8
  %s11 = scalar_select 0, %s10, %s8
  $region1: #{content_mlp_forward.1} parent=0
    #allocation2 [shape = 'u8[4096]{0}', space=vmem, size = 0x1000, scoped, tag = 'output window, operand 0, single buffered']
    #allocation3 [shape = 's32[1]{0}', space=sflag, size = 0x4, scoped, tag = 'scoped memory for content_mlp_forward.1']
    %12 = vsyncpa [#allocation3], 0
    // Predicated region
    $region2: #{content_mlp_forward.1} parent=1 // pred_check
      _
    $region3: #{content_mlp_forward.1} parent=1 // pred_check_branch
      %14 = sbr.rel (0) target = $region5
    $region4: #{content_mlp_forward.1} parent=1 // pred_region
      _
    $region5: #{content_mlp_forward.1} parent=1 // pred_fallthru
      _
    // Predicated region
    $region6: #{content_mlp_forward.1} parent=1 // pred_check
      _
    $region7: #{content_mlp_forward.1} parent=1 // pred_check_branch
      %16 = sbr.rel (0) target = $region9
    $region8: #{content_mlp_forward.1} parent=1 // pred_region
      _
    $region9: #{content_mlp_forward.1} parent=1 // pred_fallthru
      _
    // Predicated region
    $region10: #{content_mlp_forward.1} parent=1 // pred_check
      _
    $region11: #{content_mlp_forward.1} parent=1 // pred_check_branch
      %18 = sbr.rel (0) target = $region13
    $region12: #{content_mlp_forward.1} parent=1 // pred_region
      _
    $region13: #{content_mlp_forward.1} parent=1 // pred_fallthru
      _
    // Predicated region
    $region14: #{content_mlp_forward.1} parent=1 // pred_check
      _
    $region15: #{content_mlp_forward.1} parent=1 // pred_check_branch
      %20 = sbr.rel (0) target = $region17
    $region16: #{content_mlp_forward.1} parent=1 // pred_region
      _
    $region17: #{content_mlp_forward.1} parent=1 // pred_fallthru
      _
    // Predicated region
    $region18: #{content_mlp_forward.1} parent=1 // pred_check
      _
    $region19: #{content_mlp_forward.1} parent=1 // pred_check_branch
      %22 = sbr.rel (0) target = $region21
    $region20: #{content_mlp_forward.1} parent=1 // pred_region
      _
    $region21: #{content_mlp_forward.1} parent=1 // pred_fallthru
      _
    // Predicated region
    $region22: #{content_mlp_forward.1} parent=1 // pred_check
      _
    $region23: #{content_mlp_forward.1} parent=1 // pred_check_branch
      %24 = sbr.rel (0) target = $region25
    $region24: #{content_mlp_forward.1} parent=1 // pred_region
      _
    $region25: #{content_mlp_forward.1} parent=1 // pred_fallthru
      _
    // Predicated region
    $region26: #{content_mlp_forward.1} parent=1 // pred_check
      _
    $region27: #{content_mlp_forward.1} parent=1 // pred_check_branch
      %26 = sbr.rel (0) target = $region29
    $region28: #{content_mlp_forward.1} parent=1 // pred_region
      _
    $region29: #{content_mlp_forward.1} parent=1 // pred_fallthru
      _
    %v27 = vld [vmem:[%s0] sm:$0xff]
    %v28 = vld [vmem:[%s2] sm:$0xff]
    %v29 = vld [vmem:[%s2 + $0x8] sm:$0xff]
    %v30 = vld [vmem:[%s1] sm:$0xff]
    %v31 = vld [vmem:[%s3] sm:$0xff]
    %v32 = vld [vmem:[%s3 + $0x8] sm:$0xff]
    %vm33 = vcmask 130048
    %v35 = vsel %vm33, %v30, 0
    %37 = vmatprep.subr.mxu0 0.0
    %38 = vmatpush1.msra.mxu0 %v31
    %39 = vmatprep.subr.mxu0 0.0
    %40 = vmatpush1.msra.mxu0 %v32
    %41 = vmatprep.subr.mxu0 0.0
    %42 = vmatpush1.msra.mxu0 0.0
    %43 = vmatprep.subr.mxu0 0.0
    %44 = vmatpush1.msra.mxu0 0.0
    %45 = vmatprep.subr.mxu0 0.0
    %46 = vmatpush1.msra.mxu0 0.0
    %47 = vmatprep.subr.mxu0 0.0
    %48 = vmatpush1.msra.mxu0 0.0
    %49 = vmatprep.subr.mxu0 0.0
    %50 = vmatpush1.msra.mxu0 0.0
    %51 = vmatprep.subr.mxu0 0.0
    %52 = vmatpush1.msra.mxu0 0.0
    %53 = vmatprep.subr.mxu0 0.0
    %54 = vmatpush1.msra.mxu0 0.0
    %55 = vmatprep.subr.mxu0 0.0
    %56 = vmatpush1.msra.mxu0 0.0
    %57 = vmatprep.subr.mxu0 0.0
    %58 = vmatpush1.msra.mxu0 0.0
    %59 = vmatprep.subr.mxu0 0.0
    %60 = vmatpush1.msra.mxu0 0.0
    %61 = vmatprep.subr.mxu0 0.0
    %62 = vmatpush1.msra.mxu0 0.0
    %63 = vmatprep.subr.mxu0 0.0
    %64 = vmatpush1.msra.mxu0 0.0
    %65 = vmatprep.subr.mxu0 0.0
    %66 = vmatpush1.msra.mxu0 0.0
    %67 = vmatprep.subr.mxu0 0.0
    %68 = vmatpush1.msra.mxu0 0.0
    %69 = vmatprep.subr.mxu0 0.0
    %70 = vmatpush1.msra.mxu0 0.0
    %71 = vmatprep.subr.mxu0 0.0
    %72 = vmatpush1.msra.mxu0 0.0
    %73 = vmatprep.subr.mxu0 0.0
    %74 = vmatpush1.msra.mxu0 0.0
    %75 = vmatprep.subr.mxu0 0.0
    %76 = vmatpush1.msra.mxu0 0.0
    %77 = vmatprep.subr.mxu0 0.0
    %78 = vmatpush1.msra.mxu0 0.0
    %79 = vmatprep.subr.mxu0 0.0
    %80 = vmatpush1.msra.mxu0 0.0
    %81 = vmatprep.subr.mxu0 0.0
    %82 = vmatpush1.msra.mxu0 0.0
    %83 = vmatprep.subr.mxu0 0.0
    %84 = vmatpush1.msra.mxu0 0.0
    %85 = vmatprep.subr.mxu0 0.0
    %86 = vmatpush1.msra.mxu0 0.0
    %87 = vmatprep.subr.mxu0 0.0
    %88 = vmatpush1.msra.mxu0 0.0
    %89 = vmatprep.subr.mxu0 0.0
    %90 = vmatpush1.msra.mxu0 0.0
    %91 = vmatprep.subr.mxu0 0.0
    %92 = vmatpush1.msra.mxu0 0.0
    %93 = vmatprep.subr.mxu0 0.0
    %94 = vmatpush1.msra.mxu0 0.0
    %95 = vmatprep.subr.mxu0 0.0
    %96 = vmatpush1.msra.mxu0 0.0
    %97 = vmatprep.subr.mxu0 0.0
    %98 = vmatpush1.msra.mxu0 0.0
    %99 = vmatprep.subr.mxu0 0.0
    %100 = vmatpush1.msra.mxu0 0.0
    %101 = vmatprep.mubr.f32.mxu0 0.0
    %102 = vmatmul.mubr.f32.gmra.mrb[0].mxu0 %v35
    %v103 = vpop.f32.mrb[0].mxu0
    %v104 = vadd.f32 0.0, %v103
    %v105 = vpop.f32.mrb[0].mxu0
    %106 = vdwg.mxu0
    %v108 = vsel %vm33, %v27, 0
    %110 = vmatprep.subr.mxu0 0.0
    %111 = vmatpush1.msra.mxu0 %v28
    %112 = vmatprep.subr.mxu0 0.0
    %113 = vmatpush1.msra.mxu0 %v29
    %114 = vmatprep.subr.mxu0 0.0
    %115 = vmatpush1.msra.mxu0 0.0
    %116 = vmatprep.subr.mxu0 0.0
    %117 = vmatpush1.msra.mxu0 0.0
    %118 = vmatprep.subr.mxu0 0.0
    %119 = vmatpush1.msra.mxu0 0.0
    %120 = vmatprep.subr.mxu0 0.0
    %121 = vmatpush1.msra.mxu0 0.0
    %122 = vmatprep.subr.mxu0 0.0
    %123 = vmatpush1.msra.mxu0 0.0
    %124 = vmatprep.subr.mxu0 0.0
    %125 = vmatpush1.msra.mxu0 0.0
    %126 = vmatprep.subr.mxu0 0.0
    %127 = vmatpush1.msra.mxu0 0.0
    %128 = vmatprep.subr.mxu0 0.0
    %129 = vmatpush1.msra.mxu0 0.0
    %130 = vmatprep.subr.mxu0 0.0
    %131 = vmatpush1.msra.mxu0 0.0
    %132 = vmatprep.subr.mxu0 0.0
    %133 = vmatpush1.msra.mxu0 0.0
    %134 = vmatprep.subr.mxu0 0.0
    %135 = vmatpush1.msra.mxu0 0.0
    %136 = vmatprep.subr.mxu0 0.0
    %137 = vmatpush1.msra.mxu0 0.0
    %138 = vmatprep.subr.mxu0 0.0
    %139 = vmatpush1.msra.mxu0 0.0
    %140 = vmatprep.subr.mxu0 0.0
    %141 = vmatpush1.msra.mxu0 0.0
    %142 = vmatprep.subr.mxu0 0.0
    %143 = vmatpush1.msra.mxu0 0.0
    %144 = vmatprep.subr.mxu0 0.0
    %145 = vmatpush1.msra.mxu0 0.0
    %146 = vmatprep.subr.mxu0 0.0
    %147 = vmatpush1.msra.mxu0 0.0
    %148 = vmatprep.subr.mxu0 0.0
    %149 = vmatpush1.msra.mxu0 0.0
    %150 = vmatprep.subr.mxu0 0.0
    %151 = vmatpush1.msra.mxu0 0.0
    %152 = vmatprep.subr.mxu0 0.0
    %153 = vmatpush1.msra.mxu0 0.0
    %154 = vmatprep.subr.mxu0 0.0
    %155 = vmatpush1.msra.mxu0 0.0
    %156 = vmatprep.subr.mxu0 0.0
    %157 = vmatpush1.msra.mxu0 0.0
    %158 = vmatprep.subr.mxu0 0.0
    %159 = vmatpush1.msra.mxu0 0.0
    %160 = vmatprep.subr.mxu0 0.0
    %161 = vmatpush1.msra.mxu0 0.0
    %162 = vmatprep.subr.mxu0 0.0
    %163 = vmatpush1.msra.mxu0 0.0
    %164 = vmatprep.subr.mxu0 0.0
    %165 = vmatpush1.msra.mxu0 0.0
    %166 = vmatprep.subr.mxu0 0.0
    %167 = vmatpush1.msra.mxu0 0.0
    %168 = vmatprep.subr.mxu0 0.0
    %169 = vmatpush1.msra.mxu0 0.0
    %170 = vmatprep.subr.mxu0 0.0
    %171 = vmatpush1.msra.mxu0 0.0
    %172 = vmatprep.subr.mxu0 0.0
    %173 = vmatpush1.msra.mxu0 0.0
    %174 = vmatprep.mubr.f32.mxu0 0.0
    %175 = vmatmul.mubr.f32.gmra.mrb[0].mxu0 %v108
    %v176 = vpop.f32.mrb[0].mxu0
    %v177 = vadd.f32 %v104, %v176
    %v178 = vpop.f32.mrb[0].mxu0
    %179 = vdwg.mxu0
    %v180 = vld [vmem:[%s4] sm:$0x1]
    %v182 = vlaneseq
    %v183 = vshrl.u32 %v182, 7
    %v184 = vsub.s32 0, %v183
    %v185 = vrot.slane %v180, %v184
    %v187 = vadd.f32 %v177, %v185
    %v188 = vmax.f32 %v187, 0.0
    %v189 = vld [vmem:[%s5] sm:$0xff]
    %v190 = vld [vmem:[%s5 + $0x8] sm:$0xff]
    %v191 = vld [vmem:[%s5 + $0x10] sm:$0xff]
    %v192 = vld [vmem:[%s5 + $0x18] sm:$0xff]
    %v193 = vld [vmem:[%s5 + $0x20] sm:$0xff]
    %v194 = vld [vmem:[%s5 + $0x28] sm:$0xff]
    %v195 = vld [vmem:[%s5 + $0x30] sm:$0xff]
    %v196 = vld [vmem:[%s5 + $0x38] sm:$0xff]
    %v197 = vld [vmem:[%s5 + $0x40] sm:$0xff]
    %v198 = vld [vmem:[%s5 + $0x48] sm:$0xff]
    %v199 = vld [vmem:[%s5 + $0x50] sm:$0xff]
    %v200 = vld [vmem:[%s5 + $0x58] sm:$0xff]
    %v201 = vld [vmem:[%s5 + $0x60] sm:$0xff]
    %v202 = vld [vmem:[%s5 + $0x68] sm:$0xff]
    %v203 = vld [vmem:[%s5 + $0x70] sm:$0xff]
    %v204 = vld [vmem:[%s5 + $0x78] sm:$0xff]
    %v205 = vld [vmem:[%s6] sm:$0x1]
    %v207 = vlaneseq
    %v208 = vshrl.u32 %v207, 7
    %v209 = vsub.s32 0, %v208
    %v210 = vrot.slane %v205, %v209
    %212 = vmatprep.subr.mxu0 0.0
    %213 = vmatpush1.msra.mxu0 %v189
    %214 = vmatprep.subr.mxu0 0.0
    %215 = vmatpush1.msra.mxu0 %v190
    %216 = vmatprep.subr.mxu0 0.0
    %217 = vmatpush1.msra.mxu0 %v191
    %218 = vmatprep.subr.mxu0 0.0
    %219 = vmatpush1.msra.mxu0 %v192
    %220 = vmatprep.subr.mxu0 0.0
    %221 = vmatpush1.msra.mxu0 %v193
    %222 = vmatprep.subr.mxu0 0.0
    %223 = vmatpush1.msra.mxu0 %v194
    %224 = vmatprep.subr.mxu0 0.0
    %225 = vmatpush1.msra.mxu0 %v195
    %226 = vmatprep.subr.mxu0 0.0
    %227 = vmatpush1.msra.mxu0 %v196
    %228 = vmatprep.subr.mxu0 0.0
    %229 = vmatpush1.msra.mxu0 %v197
    %230 = vmatprep.subr.mxu0 0.0
    %231 = vmatpush1.msra.mxu0 %v198
    %232 = vmatprep.subr.mxu0 0.0
    %233 = vmatpush1.msra.mxu0 %v199
    %234 = vmatprep.subr.mxu0 0.0
    %235 = vmatpush1.msra.mxu0 %v200
    %236 = vmatprep.subr.mxu0 0.0
    %237 = vmatpush1.msra.mxu0 %v201
    %238 = vmatprep.subr.mxu0 0.0
    %239 = vmatpush1.msra.mxu0 %v202
    %240 = vmatprep.subr.mxu0 0.0
    %241 = vmatpush1.msra.mxu0 %v203
    %242 = vmatprep.subr.mxu0 0.0
    %243 = vmatpush1.msra.mxu0 %v204
    %244 = vmatprep.subr.mxu0 0.0
    %245 = vmatpush1.msra.mxu0 0.0
    %246 = vmatprep.subr.mxu0 0.0
    %247 = vmatpush1.msra.mxu0 0.0
    %248 = vmatprep.subr.mxu0 0.0
    %249 = vmatpush1.msra.mxu0 0.0
    %250 = vmatprep.subr.mxu0 0.0
    %251 = vmatpush1.msra.mxu0 0.0
    %252 = vmatprep.subr.mxu0 0.0
    %253 = vmatpush1.msra.mxu0 0.0
    %254 = vmatprep.subr.mxu0 0.0
    %255 = vmatpush1.msra.mxu0 0.0
    %256 = vmatprep.subr.mxu0 0.0
    %257 = vmatpush1.msra.mxu0 0.0
    %258 = vmatprep.subr.mxu0 0.0
    %259 = vmatpush1.msra.mxu0 0.0
    %260 = vmatprep.subr.mxu0 0.0
    %261 = vmatpush1.msra.mxu0 0.0
    %262 = vmatprep.subr.mxu0 0.0
    %263 = vmatpush1.msra.mxu0 0.0
    %264 = vmatprep.subr.mxu0 0.0
    %265 = vmatpush1.msra.mxu0 0.0
    %266 = vmatprep.subr.mxu0 0.0
    %267 = vmatpush1.msra.mxu0 0.0
    %268 = vmatprep.subr.mxu0 0.0
    %269 = vmatpush1.msra.mxu0 0.0
    %270 = vmatprep.subr.mxu0 0.0
    %271 = vmatpush1.msra.mxu0 0.0
    %272 = vmatprep.subr.mxu0 0.0
    %273 = vmatpush1.msra.mxu0 0.0
    %274 = vmatprep.subr.mxu0 0.0
    %275 = vmatpush1.msra.mxu0 0.0
    %276 = vmatprep.mubr.f32.mxu0 0.0
    %277 = vmatmul.mubr.f32.gmra.mrb[0].mxu0 %v188
    %v278 = vpop.f32.mrb[0].mxu0
    %v279 = vadd.f32 %v210, %v278
    %v280 = vpop.f32.mrb[0].mxu0
    %281 = vdwg.mxu0
    %v282 = vmax.f32 %v279, 0.0
    %vm283 = vcmask 261120
    %284 = vst.msk [vmem:[#allocation2] sm:$0xff] %vm283, %v282
    // Predicated region
    $region30: #{content_mlp_forward.1} parent=1 // pred_check
      _
    $region31: #{content_mlp_forward.1} parent=1 // pred_check_branch
      %286 = sbr.rel (0) target = $region33
    $region32: #{content_mlp_forward.1} parent=1 // pred_region
      %s288 = ssub.s32 128, 128
      %289 = vsyncadd [#allocation3], %s288
      %s291 = sshll.u32 [#allocation2], 4
      %s292 = int_to_ptr.vmem [resolvable:$true] %s291
      %294 = dma.vmem_to_hbm [thread:$0]  %s292, 128, %s7, [#allocation3]
    $region33: #{content_mlp_forward.1} parent=1 // pred_fallthru
      _
    // Predicated region
    $region34: #{content_mlp_forward.1} parent=1 // pred_check
      _
    $region35: #{content_mlp_forward.1} parent=1 // pred_check_branch
      %296 = sbr.rel (0) target = $region37
    $region36: #{content_mlp_forward.1} parent=1 // pred_region
      %297 = dma.done [#allocation3], 128
    $region37: #{content_mlp_forward.1} parent=1 // pred_fallthru
      _
    %298 = vsyncpa [#allocation3], 1

</llo_original>
